<compile_context>
chip_gen: v7x
topology: tpu7x:2x2x1
jax: 0.10.0
libtpu: 0.0.40
codegen_flags: <defaults>
</compile_context>

<pallas_src>
import functools

import jax
import jax.numpy as jnp
from jax.experimental import pallas as pl
from jax.experimental.pallas import tpu as pltpu


def qnet_kernel(xT_ref, w1T_ref, b1_ref, w2_ref, oT_ref, *, use_bf16=False):
    xT = xT_ref[...]                # (num_inputs, TB)  -- batch on lanes
    w1T = w1T_ref[...]              # (HP, num_inputs)  -- hidden padded to HP
    if use_bf16:
        h = jnp.dot(w1T.astype(jnp.bfloat16), xT.astype(jnp.bfloat16),
                    preferred_element_type=jnp.float32)
    else:
        h = jnp.dot(w1T, xT, preferred_element_type=jnp.float32)
    h = jnp.maximum(h + b1_ref[...], 0.0)            # relu(linear1), (HP, TB)
    # TODO(synk): nn.Dropout() is identity here (eval-mode); train-mode parity
    # would need pltpu.prng_seed/prng_random_bits masking + 1/(1-p) rescale.
    # Layer 2 (N=1) on VPU/XLU: broadcast-multiply + sublane reduction.
    # b2 arrives via the hook column (h[H,:]==1, w2[H]==b2) set in prep_params.
    y = jnp.sum(h * w2_ref[...], axis=0, keepdims=True)   # (1, TB)
    oT_ref[...] = jnp.maximum(y, 0.0)                      # relu(linear2)


@functools.partial(jax.jit, static_argnames=("tb", "use_bf16"))
def qnet_forward_batched(states, packed, *, tb=128, use_bf16=False):
    """states: (B, num_inputs) f32  ->  (B, 1) f32 Q-values."""
    w1T_p, b1_col, w2_col = packed
    B, NI = states.shape
    HP = w1T_p.shape[0]
    Bp = ((B + tb - 1) // tb) * tb                 # pad batch to tile multiple
    xT = states.astype(jnp.float32).T              # (NI, B) -- batch on lanes
    if Bp != B:
        xT = jnp.pad(xT, ((0, 0), (0, Bp - B)))

    out = pl.pallas_call(
        functools.partial(qnet_kernel, use_bf16=use_bf16),
        out_shape=jax.ShapeDtypeStruct((1, Bp), jnp.float32),
        grid=(Bp // tb,),
        in_specs=[
            pl.BlockSpec((NI, tb), lambda i: (0, i), memory_space=pltpu.VMEM),
            pl.BlockSpec((HP, NI), lambda i: (0, 0), memory_space=pltpu.VMEM),
            pl.BlockSpec((HP, 1), lambda i: (0, 0), memory_space=pltpu.VMEM),
            pl.BlockSpec((HP, 1), lambda i: (0, 0), memory_space=pltpu.VMEM),
        ],
        out_specs=pl.BlockSpec((1, tb), lambda i: (0, i), memory_space=pltpu.VMEM),
        compiler_params=pltpu.CompilerParams(dimension_semantics=("parallel",)),
    )(xT, w1T_p, b1_col, w2_col)

    return out[0, :B][:, None]                     # (B, 1)


@jax.jit
def qnet_forward_single(state, w1, b1, w2, b2):
    """Per-step act() path: plain jnp under jit (no Pallas -- launch cost dominates)."""
    x = state.astype(jnp.float32)[None, :]
    h = jnp.maximum(
        jnp.dot(x, w1, precision=jax.lax.Precision.HIGHEST) + b1[None, :], 0.0)
    y = jnp.maximum(
        jnp.dot(h, w2, precision=jax.lax.Precision.HIGHEST) + b2[None, :], 0.0)
    return y                                        # (1, 1)


def init_params(key, num_inputs, hidden_size):
    """Mirror the PyTorch module's init (weights stored transposed: (in, out))."""
    k1, k2, k3, k4 = jax.random.split(key, 4)
    bound1 = (6.0 / (num_inputs + hidden_size)) ** 0.5        # xavier_uniform
    w1 = jax.random.uniform(k1, (num_inputs, hidden_size),
                            minval=-bound1, maxval=bound1, dtype=jnp.float32)
    bb1 = 1.0 / (num_inputs ** 0.5)                            # PyTorch bias default
    b1 = jax.random.uniform(k2, (hidden_size,), minval=-bb1, maxval=bb1,
                            dtype=jnp.float32)
    bound2 = (6.0 / (hidden_size + 1)) ** 0.5
    w2 = jax.random.uniform(k3, (hidden_size, 1),
                            minval=-bound2, maxval=bound2, dtype=jnp.float32)
    bb2 = 1.0 / (hidden_size ** 0.5)
    b2 = jax.random.uniform(k4, (1,), minval=-bb2, maxval=bb2, dtype=jnp.float32)
    return w1, b1, w2, b2


def prep_params(w1, b1, w2, b2):
    """One-time packing into kernel layout.

    - hidden padded with zeros to HP (multiple of 128, with room for the hook)
    - b1 stored as an (HP,1) column
    - b2 folded via hook column H: b1_col[H]=1 (so h[H,:]==1), w2_col[H]=b2
    """
    NI, H = w1.shape
    HP = ((H + 1 + 127) // 128) * 128
    w1T_p = jnp.zeros((HP, NI), jnp.float32).at[:H, :].set(w1.T)
    b1_col = (jnp.zeros((HP, 1), jnp.float32)
              .at[:H, 0].set(b1)
              .at[H, 0].set(1.0))
    w2_col = (jnp.zeros((HP, 1), jnp.float32)
              .at[:H, 0].set(w2[:, 0])
              .at[H, 0].set(b2[0]))
    return w1T_p, b1_col, w2_col


if __name__ == "__main__":
    num_inputs = 8      # state features (incl. appended action, as in act())
    hidden_size = 32
    batch = 256         # batched evaluation path (multiple of 128 tile)

    key = jax.random.PRNGKey(0)
    k_params, k_state = jax.random.split(key)
    w1, b1, w2, b2 = init_params(k_params, num_inputs, hidden_size)
    packed = prep_params(w1, b1, w2, b2)
    states = jax.random.normal(k_state, (batch, num_inputs), dtype=jnp.float32)

    # Batched Pallas kernel (f32 MXU path).
    out = jax.block_until_ready(qnet_forward_batched(states, packed))

    # Plain-JAX reference (eval-mode dropout), highest-precision matmuls.
    h_ref = jnp.maximum(
        jnp.dot(states, w1, precision=jax.lax.Precision.HIGHEST) + b1[None, :], 0.0)
    y_ref = jnp.maximum(
        jnp.dot(h_ref, w2, precision=jax.lax.Precision.HIGHEST) + b2[None, :], 0.0)

    assert out.shape == (batch, 1)
    assert jnp.allclose(out, y_ref, atol=1e-4, rtol=1e-4)

    # bf16 MXU-operand fast path (v6e/v7x); accumulation stays f32.
    out_bf16 = jax.block_until_ready(
        qnet_forward_batched(states, packed, use_bf16=True))
    assert out_bf16.shape == (batch, 1)
    assert jnp.allclose(out_bf16, y_ref, atol=5e-2, rtol=5e-2)

    # Unbatched per-step path (act()) uses plain jnp, not Pallas.
    single = jax.block_until_ready(
        qnet_forward_single(states[0], w1, b1, w2, b2))
    assert single.shape == (1, 1)
    assert jnp.allclose(single, y_ref[0:1], atol=1e-4, rtol=1e-4)

    print("KERNEL_OK")
</pallas_src>

<mosaic_0001>
module attributes {stable_mosaic.version = 11 : i64} {
  func.func @qnet_kernel(%arg0: i32, %arg1: memref<8x128xf32, #tpu.memory_space<vmem>>, %arg2: memref<128x8xf32, #tpu.memory_space<vmem>>, %arg3: memref<128x1xf32, #tpu.memory_space<vmem>>, %arg4: memref<128x1xf32, #tpu.memory_space<vmem>>, %arg5: memref<1x128xf32, #tpu.memory_space<vmem>>) attributes {dimension_semantics = [#tpu.dimension_semantics<parallel>], iteration_bounds = array<i64: 2>, scalar_prefetch = 0 : i64, scratch_operands = 0 : i64, tpu.core_type = #tpu.core_type<tc>, window_params = [{transform_indices = @transform_0, window_bounds = array<i64: 8, 128>}, {pipeline_mode = #tpu.pipeline_mode<synchronous>, transform_indices = @transform_1, window_bounds = array<i64: 128, 8>}, {pipeline_mode = #tpu.pipeline_mode<synchronous>, transform_indices = @transform_2, window_bounds = array<i64: 128, 1>}, {pipeline_mode = #tpu.pipeline_mode<synchronous>, transform_indices = @transform_3, window_bounds = array<i64: 128, 1>}, {transform_indices = @transform_4, window_bounds = array<i64: 1, 128>}]} {
    %c0 = arith.constant 0 : index
    %c0_0 = arith.constant 0 : index
    %0 = vector.load %arg1[%c0, %c0_0] : memref<8x128xf32, #tpu.memory_space<vmem>>, vector<8x128xf32>
    %c0_1 = arith.constant 0 : index
    %c0_2 = arith.constant 0 : index
    %1 = vector.load %arg2[%c0_1, %c0_2] : memref<128x8xf32, #tpu.memory_space<vmem>>, vector<128x8xf32>
    %cst = arith.constant dense<0.000000e+00> : vector<128x128xf32>
    %2 = tpu.matmul %1, %0, %cst {dimension_numbers = #tpu.dot_dimension_numbers<[1], [0], [0], [1], [0, 0, 1, 1], [], []>} : vector<128x8xf32>, vector<8x128xf32>, vector<128x128xf32> -> vector<128x128xf32>
    %c0_3 = arith.constant 0 : index
    %c0_4 = arith.constant 0 : index
    %3 = vector.load %arg3[%c0_3, %c0_4] : memref<128x1xf32, #tpu.memory_space<vmem>>, vector<128x1xf32>
    %4 = vector.broadcast %3 : vector<128x1xf32> to vector<128x128xf32>
    %5 = arith.addf %2, %4 : vector<128x128xf32>
    %cst_5 = arith.constant 0.000000e+00 : f32
    %6 = vector.broadcast %cst_5 : f32 to vector<128x128xf32>
    %7 = arith.maximumf %5, %6 : vector<128x128xf32>
    %c0_6 = arith.constant 0 : index
    %c0_7 = arith.constant 0 : index
    %8 = vector.load %arg4[%c0_6, %c0_7] : memref<128x1xf32, #tpu.memory_space<vmem>>, vector<128x1xf32>
    %9 = vector.broadcast %8 : vector<128x1xf32> to vector<128x128xf32>
    %10 = arith.mulf %7, %9 : vector<128x128xf32>
    %cst_8 = arith.constant dense<0.000000e+00> : vector<128xf32>
    %11 = vector.multi_reduction <add>, %10, %cst_8 [0] : vector<128x128xf32> to vector<128xf32>
    %12 = vector.shape_cast %11 : vector<128xf32> to vector<1x128xf32>
    %cst_9 = arith.constant 0.000000e+00 : f32
    %13 = vector.broadcast %cst_9 : f32 to vector<1x128xf32>
    %14 = arith.maximumf %12, %13 : vector<1x128xf32>
    %c0_10 = arith.constant 0 : index
    %c0_11 = arith.constant 0 : index
    %15 = vector.load %arg5[%c0_10, %c0_11] : memref<1x128xf32, #tpu.memory_space<vmem>>, vector<1x128xf32>
    tpu.vector_store %arg5[%c0_10, %c0_11], %14 {strides = array<i32>} : memref<1x128xf32, #tpu.memory_space<vmem>>, vector<1x128xf32>,
    return
  }
  func.func @transform_0(%arg0: i32) -> (i32, i32) {
    %c0_i32 = arith.constant 0 : i32
    %c0_i32_0 = arith.constant 0 : i32
    return %c0_i32, %arg0 : i32, i32
  }
  func.func @transform_1(%arg0: i32) -> (i32, i32) {
    %c0_i32 = arith.constant 0 : i32
    %c0_i32_0 = arith.constant 0 : i32
    %c0_i32_1 = arith.constant 0 : i32
    return %c0_i32, %c0_i32_0 : i32, i32
  }
  func.func @transform_2(%arg0: i32) -> (i32, i32) {
    %c0_i32 = arith.constant 0 : i32
    %c0_i32_0 = arith.constant 0 : i32
    %c0_i32_1 = arith.constant 0 : i32
    return %c0_i32, %c0_i32_0 : i32, i32
  }
  func.func @transform_3(%arg0: i32) -> (i32, i32) {
    %c0_i32 = arith.constant 0 : i32
    %c0_i32_0 = arith.constant 0 : i32
    %c0_i32_1 = arith.constant 0 : i32
    return %c0_i32, %c0_i32_0 : i32, i32
  }
  func.func @transform_4(%arg0: i32) -> (i32, i32) {
    %c0_i32 = arith.constant 0 : i32
    %c0_i32_0 = arith.constant 0 : i32
    return %c0_i32, %arg0 : i32, i32
  }
}

</mosaic_0001>

<llo_original>
// kernel: qnet_forward_batched.1
$region0: #{qnet_forward_batched.1}
  #allocation0 [shape = 'u32[]', space=smem, size = 0x4, offset = 0x4, fixed_abs, tag = 'smem constant byte address 0x4 - core index']
  #allocation1 [shape = 'u32[144,128]{1,0:T(1,128)}', space=vmem, size = 0x12000, scoped, tag = 'internal scratch']
  %s0 = inlined_call_operand.vmem [shape: f32[8,256], index: 0, kind: input, shape index: {}]
  %s1 = inlined_call_operand.vmem [shape: f32[128,8], index: 1, kind: input, shape index: {}]
  %s2 = inlined_call_operand.vmem [shape: f32[128,1], index: 2, kind: input, shape index: {}]
  %s3 = inlined_call_operand.vmem [shape: f32[128,1], index: 3, kind: input, shape index: {}]
  %s4 = inlined_call_operand.hbm [shape: f32[1,256], index: 4, kind: output, shape index: {}]
  %s5 = sld [smem:[#allocation0]]
  $region49: #{qnet_forward_batched.1} parent=0
    _
  %s7 = ssub.s32 1, %s5
  %s8 = scalar_select 0, %s7, %s5
  $region1: #{qnet_forward_batched.1} parent=0
    #allocation2 [shape = 'u8[1024]{0}', space=vmem, size = 0x400, scoped, tag = 'output window, operand 0']
    #allocation3 [shape = 's32[2]{0}', space=sflag, size = 0x8, scoped, tag = 'scoped memory for qnet_forward_batched.1']
    %9 = vsyncpa [#allocation3], 0
    %s10 = scalar_lea.sflag [#allocation3], 1
    %11 = vsyncpa %s10, 0
    loop: start=0, step=1, limit=4
    $region2: #{qnet_forward_batched.1} parent=1 // loop_pre_header
      _
    $region3: #{qnet_forward_batched.1} parent=1 // loop_header
      %s13 = sphi 0, %s17
      %p14 = scmp.ge.s32.totalorder %s13, 4
      %s23 = sphi 0, %s25
      %s26 = sphi 0, %s23
      %s27 = sphi 0, %s26
      %s43 = sphi 0, %s27
      %s47 = sphi 0, %s47
      %s49 = sphi 0, %s47
      %s50 = sphi 0, %s49
      %s64 = sphi 0, %s50
      %s68 = sphi 0, %s68
      %s70 = sphi 0, %s68
      %s71 = sphi 0, %s70
      %s85 = sphi 0, %s71
      %s89 = sphi 0, %s89
      %s91 = sphi 0, %s89
      %s92 = sphi 0, %s91
      %s106 = sphi 0, %s92
      %s112 = sphi 0, %s114
      %s115 = sphi 0, %s112
      %s116 = sphi 0, %s115
      %s132 = sphi 0, %s116
    $region4: #{qnet_forward_batched.1} parent=1 // loop_header_branch
      %16 = sbr.rel (%p14) target = $region8
    $region5: #{qnet_forward_batched.1} parent=1 // loop_body
      %s18 = ssub.s32 %s13, 1
      %s19 = ssub.s32 %s13, 2
      %s20 = sadd.s32 %s13, 1
      %s21 = ssub.s32 %s13, %s20
      %p22 = scmp.eq.s32.totalorder %s21, 0
      %s24 = sadd.s32 %s23, 1
      %s25 = scalar_select %p22, %s23, %s24
      %p28 = pneg %p22
      %p29 = scmp.eq.s32.totalorder %s13, 1
      %p30 = por %p28, %p29
      %p31 = scmp.ne.s32.totalorder %s23, %s26
      %p32 = scmp.eq.s32.totalorder %s13, 0
      %p33 = por %p31, %p32
      %p34 = scmp.ne.s32.totalorder %s23, %s26
      %p35 = scmp.eq.s32.totalorder %s18, 1
      %p36 = por %p34, %p35
      %p37 = scmp.ne.s32.totalorder %s26, %s27
      %p38 = scmp.eq.s32.totalorder %s18, 0
      %p39 = por %p37, %p38
      %p40 = scmp.ne.s32.totalorder %s26, %s27
      %p41 = scmp.eq.s32.totalorder %s19, 1
      %p42 = por %p40, %p41
      %p44 = scmp.ne.s32.totalorder %s27, %s43
      %p45 = scmp.eq.s32.totalorder %s19, 0
      %p46 = por %p44, %p45
      %s48 = sadd.s32 %s47, 1
      %p51 = scmp.eq.s32.totalorder %s13, 1
      %p52 = scmp.ne.s32.totalorder %s47, %s49
      %p53 = scmp.eq.s32.totalorder %s13, 0
      %p54 = por %p52, %p53
      %p55 = scmp.ne.s32.totalorder %s47, %s49
      %p56 = scmp.eq.s32.totalorder %s18, 1
      %p57 = por %p55, %p56
      %p58 = scmp.ne.s32.totalorder %s49, %s50
      %p59 = scmp.eq.s32.totalorder %s18, 0
      %p60 = por %p58, %p59
      %p61 = scmp.ne.s32.totalorder %s49, %s50
      %p62 = scmp.eq.s32.totalorder %s19, 1
      %p63 = por %p61, %p62
      %p65 = scmp.ne.s32.totalorder %s50, %s64
      %p66 = scmp.eq.s32.totalorder %s19, 0
      %p67 = por %p65, %p66
      %s69 = sadd.s32 %s68, 1
      %p72 = scmp.eq.s32.totalorder %s13, 1
      %p73 = scmp.ne.s32.totalorder %s68, %s70
      %p74 = scmp.eq.s32.totalorder %s13, 0
      %p75 = por %p73, %p74
      %p76 = scmp.ne.s32.totalorder %s68, %s70
      %p77 = scmp.eq.s32.totalorder %s18, 1
      %p78 = por %p76, %p77
      %p79 = scmp.ne.s32.totalorder %s70, %s71
      %p80 = scmp.eq.s32.totalorder %s18, 0
      %p81 = por %p79, %p80
      %p82 = scmp.ne.s32.totalorder %s70, %s71
      %p83 = scmp.eq.s32.totalorder %s19, 1
      %p84 = por %p82, %p83
      %p86 = scmp.ne.s32.totalorder %s71, %s85
      %p87 = scmp.eq.s32.totalorder %s19, 0
      %p88 = por %p86, %p87
      %s90 = sadd.s32 %s89, 1
      %p93 = scmp.eq.s32.totalorder %s13, 1
      %p94 = scmp.ne.s32.totalorder %s89, %s91
      %p95 = scmp.eq.s32.totalorder %s13, 0
      %p96 = por %p94, %p95
      %p97 = scmp.ne.s32.totalorder %s89, %s91
      %p98 = scmp.eq.s32.totalorder %s18, 1
      %p99 = por %p97, %p98
      %p100 = scmp.ne.s32.totalorder %s91, %s92
      %p101 = scmp.eq.s32.totalorder %s18, 0
      %p102 = por %p100, %p101
      %p103 = scmp.ne.s32.totalorder %s91, %s92
      %p104 = scmp.eq.s32.totalorder %s19, 1
      %p105 = por %p103, %p104
      %p107 = scmp.ne.s32.totalorder %s92, %s106
      %p108 = scmp.eq.s32.totalorder %s19, 0
      %p109 = por %p107, %p108
      %s110 = ssub.s32 %s13, %s20
      %p111 = scmp.eq.s32.totalorder %s110, 0
      %s113 = sadd.s32 %s112, 1
      %s114 = scalar_select %p111, %s112, %s113
      %p117 = pneg %p111
      %p118 = scmp.eq.s32.totalorder %s13, 1
      %p119 = por %p117, %p118
      %p120 = scmp.ne.s32.totalorder %s112, %s115
      %p121 = scmp.eq.s32.totalorder %s13, 0
      %p122 = por %p120, %p121
      %p123 = scmp.ne.s32.totalorder %s112, %s115
      %p124 = scmp.eq.s32.totalorder %s18, 1
      %p125 = por %p123, %p124
      %p126 = scmp.ne.s32.totalorder %s115, %s116
      %p127 = scmp.eq.s32.totalorder %s18, 0
      %p128 = por %p126, %p127
      %p129 = scmp.ne.s32.totalorder %s115, %s116
      %p130 = scmp.eq.s32.totalorder %s19, 1
      %p131 = por %p129, %p130
      %p133 = scmp.ne.s32.totalorder %s116, %s132
      %p134 = scmp.eq.s32.totalorder %s19, 0
      %p135 = por %p133, %p134
      %p136 = scmp.le.s32.totalorder 1, %s13
      %p137 = scmp.lt.s32.totalorder %s13, 3
      %p138 = pnand %p136, %p137
      %p139 = pneg %p138
      // Predicated region
      $region9: #{qnet_forward_batched.1} parent=5 // pred_check
        _
      $region10: #{qnet_forward_batched.1} parent=5 // pred_check_branch
        %141 = sbr.rel (%p138) target = $region12
      $region11: #{qnet_forward_batched.1} parent=5 // pred_region
        %s142 = ssub.s32 %s13, 1
        // Predicated region
        $region13: #{qnet_forward_batched.1} parent=11 // pred_check
          %p143 = pneg %p60
        $region14: #{qnet_forward_batched.1} parent=11 // pred_check_branch
          %145 = sbr.rel (%p143) target = $region16
        $region15: #{qnet_forward_batched.1} parent=11 // pred_region
          _
        $region16: #{qnet_forward_batched.1} parent=11 // pred_fallthru
          _
        // Predicated region
        $region17: #{qnet_forward_batched.1} parent=11 // pred_check
          %p146 = pneg %p81
        $region18: #{qnet_forward_batched.1} parent=11 // pred_check_branch
          %148 = sbr.rel (%p146) target = $region20
        $region19: #{qnet_forward_batched.1} parent=11 // pred_region
          _
        $region20: #{qnet_forward_batched.1} parent=11 // pred_fallthru
          _
        // Predicated region
        $region21: #{qnet_forward_batched.1} parent=11 // pred_check
          %p149 = pneg %p102
        $region22: #{qnet_forward_batched.1} parent=11 // pred_check_branch
          %151 = sbr.rel (%p149) target = $region24
        $region23: #{qnet_forward_batched.1} parent=11 // pred_region
          _
        $region24: #{qnet_forward_batched.1} parent=11 // pred_fallthru
          _
      $region12: #{qnet_forward_batched.1} parent=5 // pred_fallthru
        _
      %p152 = scmp.lt.s32.totalorder %s13, 2
      // Predicated region
      $region25: #{qnet_forward_batched.1} parent=5 // pred_check
        %p153 = pneg %p152
      $region26: #{qnet_forward_batched.1} parent=5 // pred_check_branch
        %155 = sbr.rel (%p153) target = $region28
      $region27: #{qnet_forward_batched.1} parent=5 // pred_region
        // Predicated region
        $region29: #{qnet_forward_batched.1} parent=27 // pred_check
          %p156 = pneg %p33
        $region30: #{qnet_forward_batched.1} parent=27 // pred_check_branch
          %158 = sbr.rel (%p156) target = $region32
        $region31: #{qnet_forward_batched.1} parent=27 // pred_region
          %p159 = scmp.lt.s32.totalorder %s13, 1
          %s160 = scalar_select %p159, %s13, 1
          %s161 = smul.addr %s160, 8
          %s162 = scalar_lea.vmem %s0, %s161
        $region32: #{qnet_forward_batched.1} parent=27 // pred_fallthru
          _
      $region28: #{qnet_forward_batched.1} parent=5 // pred_fallthru
        _
      %p163 = scmp.le.s32.totalorder 1, %s13
      %p164 = scmp.lt.s32.totalorder %s13, 3
      %p165 = pnand %p163, %p164
      %p166 = pneg %p165
      // Predicated region
      $region33: #{qnet_forward_batched.1} parent=5 // pred_check
        _
      $region34: #{qnet_forward_batched.1} parent=5 // pred_check_branch
        %168 = sbr.rel (%p165) target = $region36
      $region35: #{qnet_forward_batched.1} parent=5 // pred_region
        %s169 = ssub.s32 %s13, 1
        %p170 = scmp.lt.s32.totalorder %s18, 1
        %s171 = scalar_select %p170, %s18, 1
        %s172 = smul.addr %s171, 8
        %s173 = scalar_lea.vmem %s0, %s172
        %p174 = pneg %p39
        %p175 = pneg %p36
        %p176 = pneg %p60
        %p177 = pneg %p57
        %p178 = pneg %p81
        %p179 = pneg %p78
        %p180 = pneg %p102
        %p181 = pneg %p99
        %p182 = pneg %p128
        %p183 = pneg %p125
        %s184 = sand.u32 %s115, 1
        %s185 = scalar_lea.sflag [#allocation3], %s184
        %s186 = sand.u32 %s115, 1
        %s187 = scalar_lea.vmem [#allocation2], %s186
        %p188 = scmp.lt.s32.totalorder %s18, 1
        %s189 = scalar_select %p188, %s18, 1
        %s190 = smul.addr %s189, 8
        %s191 = scalar_lea.vmem %s0, %s190
        %v192 = vld [vmem:[%s191] sm:$0xff]
        %v193 = vld [vmem:[%s1] sm:$0xff]
        %v194 = vld [vmem:[%s1 + $0x8] sm:$0xff]
        %v195 = vld [vmem:[%s1 + $0x10] sm:$0xff]
        %v196 = vld [vmem:[%s1 + $0x18] sm:$0xff]
        %v197 = vld [vmem:[%s1 + $0x20] sm:$0xff]
        %v198 = vld [vmem:[%s1 + $0x28] sm:$0xff]
        %v199 = vld [vmem:[%s1 + $0x30] sm:$0xff]
        %v200 = vld [vmem:[%s1 + $0x38] sm:$0xff]
        %v201 = vld [vmem:[%s1 + $0x40] sm:$0xff]
        %v202 = vld [vmem:[%s1 + $0x48] sm:$0xff]
        %v203 = vld [vmem:[%s1 + $0x50] sm:$0xff]
        %v204 = vld [vmem:[%s1 + $0x58] sm:$0xff]
        %v205 = vld [vmem:[%s1 + $0x60] sm:$0xff]
        %v206 = vld [vmem:[%s1 + $0x68] sm:$0xff]
        %v207 = vld [vmem:[%s1 + $0x70] sm:$0xff]
        %v208 = vld [vmem:[%s1 + $0x78] sm:$0xff]
        %v209 = vld [vmem:[%s2] sm:$0xff]
        %v210 = vld [vmem:[%s2 + $0x8] sm:$0xff]
        %v211 = vld [vmem:[%s2 + $0x10] sm:$0xff]
        %v212 = vld [vmem:[%s2 + $0x18] sm:$0xff]
        %v213 = vld [vmem:[%s2 + $0x20] sm:$0xff]
        %v214 = vld [vmem:[%s2 + $0x28] sm:$0xff]
        %v215 = vld [vmem:[%s2 + $0x30] sm:$0xff]
        %v216 = vld [vmem:[%s2 + $0x38] sm:$0xff]
        %v217 = vld [vmem:[%s2 + $0x40] sm:$0xff]
        %v218 = vld [vmem:[%s2 + $0x48] sm:$0xff]
        %v219 = vld [vmem:[%s2 + $0x50] sm:$0xff]
        %v220 = vld [vmem:[%s2 + $0x58] sm:$0xff]
        %v221 = vld [vmem:[%s2 + $0x60] sm:$0xff]
        %v222 = vld [vmem:[%s2 + $0x68] sm:$0xff]
        %v223 = vld [vmem:[%s2 + $0x70] sm:$0xff]
        %v224 = vld [vmem:[%s2 + $0x78] sm:$0xff]
        %226 = vset.pattern.permute.xlu0 0
        %227 = vperm.xlu0 %226, %v209
        %v228 = vpop.permute.xlu0 %227
        %231 = vset.pattern.permute.xlu0 0
        %232 = vperm.xlu0 %231, %v210
        %v233 = vpop.permute.xlu0 %232
        %236 = vset.pattern.permute.xlu0 0
        %237 = vperm.xlu0 %236, %v211
        %v238 = vpop.permute.xlu0 %237
        %241 = vset.pattern.permute.xlu0 0
        %242 = vperm.xlu0 %241, %v212
        %v243 = vpop.permute.xlu0 %242
        %246 = vset.pattern.permute.xlu0 0
        %247 = vperm.xlu0 %246, %v213
        %v248 = vpop.permute.xlu0 %247
        %251 = vset.pattern.permute.xlu0 0
        %252 = vperm.xlu0 %251, %v214
        %v253 = vpop.permute.xlu0 %252
        %256 = vset.pattern.permute.xlu0 0
        %257 = vperm.xlu0 %256, %v215
        %v258 = vpop.permute.xlu0 %257
        %261 = vset.pattern.permute.xlu0 0
        %262 = vperm.xlu0 %261, %v216
        %v263 = vpop.permute.xlu0 %262
        %266 = vset.pattern.permute.xlu0 0
        %267 = vperm.xlu0 %266, %v217
        %v268 = vpop.permute.xlu0 %267
        %271 = vset.pattern.permute.xlu0 0
        %272 = vperm.xlu0 %271, %v218
        %v273 = vpop.permute.xlu0 %272
        %276 = vset.pattern.permute.xlu0 0
        %277 = vperm.xlu0 %276, %v219
        %v278 = vpop.permute.xlu0 %277
        %281 = vset.pattern.permute.xlu0 0
        %282 = vperm.xlu0 %281, %v220
        %v283 = vpop.permute.xlu0 %282
        %286 = vset.pattern.permute.xlu0 0
        %287 = vperm.xlu0 %286, %v221
        %v288 = vpop.permute.xlu0 %287
        %291 = vset.pattern.permute.xlu0 0
        %292 = vperm.xlu0 %291, %v222
        %v293 = vpop.permute.xlu0 %292
        %296 = vset.pattern.permute.xlu0 0
        %297 = vperm.xlu0 %296, %v223
        %v298 = vpop.permute.xlu0 %297
        %301 = vset.pattern.permute.xlu0 0
        %302 = vperm.xlu0 %301, %v224
        %v303 = vpop.permute.xlu0 %302
        %vm305 = vcmask 64512
        %v307 = vsel %vm305, %v193, 0
        %v310 = vsel %vm305, %v194, 0
        %v313 = vsel %vm305, %v195, 0
        %v316 = vsel %vm305, %v196, 0
        %v319 = vsel %vm305, %v197, 0
        %v322 = vsel %vm305, %v198, 0
        %v325 = vsel %vm305, %v199, 0
        %v328 = vsel %vm305, %v200, 0
        %v331 = vsel %vm305, %v201, 0
        %v334 = vsel %vm305, %v202, 0
        %v337 = vsel %vm305, %v203, 0
        %v340 = vsel %vm305, %v204, 0
        %v343 = vsel %vm305, %v205, 0
        %v346 = vsel %vm305, %v206, 0
        %v349 = vsel %vm305, %v207, 0
        %v352 = vsel %vm305, %v208, 0
        %354 = vmatprep.subr.mxu0 0.0
        %355 = vmatpush1.msra.mxu0 %v192
        %356 = vmatprep.subr.mxu0 0.0
        %357 = vmatpush1.msra.mxu0 0.0
        %358 = vmatprep.subr.mxu0 0.0
        %359 = vmatpush1.msra.mxu0 0.0
        %360 = vmatprep.subr.mxu0 0.0
        %361 = vmatpush1.msra.mxu0 0.0
        %362 = vmatprep.subr.mxu0 0.0
        %363 = vmatpush1.msra.mxu0 0.0
        %364 = vmatprep.subr.mxu0 0.0
        %365 = vmatpush1.msra.mxu0 0.0
        %366 = vmatprep.subr.mxu0 0.0
        %367 = vmatpush1.msra.mxu0 0.0
        %368 = vmatprep.subr.mxu0 0.0
        %369 = vmatpush1.msra.mxu0 0.0
        %370 = vmatprep.subr.mxu0 0.0
        %371 = vmatpush1.msra.mxu0 0.0
        %372 = vmatprep.subr.mxu0 0.0
        %373 = vmatpush1.msra.mxu0 0.0
        %374 = vmatprep.subr.mxu0 0.0
        %375 = vmatpush1.msra.mxu0 0.0
        %376 = vmatprep.subr.mxu0 0.0
        %377 = vmatpush1.msra.mxu0 0.0
        %378 = vmatprep.subr.mxu0 0.0
        %379 = vmatpush1.msra.mxu0 0.0
        %380 = vmatprep.subr.mxu0 0.0
        %381 = vmatpush1.msra.mxu0 0.0
        %382 = vmatprep.subr.mxu0 0.0
        %383 = vmatpush1.msra.mxu0 0.0
        %384 = vmatprep.subr.mxu0 0.0
        %385 = vmatpush1.msra.mxu0 0.0
        %386 = vmatprep.subr.mxu0 0.0
        %387 = vmatpush1.msra.mxu0 0.0
        %388 = vmatprep.subr.mxu0 0.0
        %389 = vmatpush1.msra.mxu0 0.0
        %390 = vmatprep.subr.mxu0 0.0
        %391 = vmatpush1.msra.mxu0 0.0
        %392 = vmatprep.subr.mxu0 0.0
        %393 = vmatpush1.msra.mxu0 0.0
        %394 = vmatprep.subr.mxu0 0.0
        %395 = vmatpush1.msra.mxu0 0.0
        %396 = vmatprep.subr.mxu0 0.0
        %397 = vmatpush1.msra.mxu0 0.0
        %398 = vmatprep.subr.mxu0 0.0
        %399 = vmatpush1.msra.mxu0 0.0
        %400 = vmatprep.subr.mxu0 0.0
        %401 = vmatpush1.msra.mxu0 0.0
        %402 = vmatprep.subr.mxu0 0.0
        %403 = vmatpush1.msra.mxu0 0.0
        %404 = vmatprep.subr.mxu0 0.0
        %405 = vmatpush1.msra.mxu0 0.0
        %406 = vmatprep.subr.mxu0 0.0
        %407 = vmatpush1.msra.mxu0 0.0
        %408 = vmatprep.subr.mxu0 0.0
        %409 = vmatpush1.msra.mxu0 0.0
        %410 = vmatprep.subr.mxu0 0.0
        %411 = vmatpush1.msra.mxu0 0.0
        %412 = vmatprep.subr.mxu0 0.0
        %413 = vmatpush1.msra.mxu0 0.0
        %414 = vmatprep.subr.mxu0 0.0
        %415 = vmatpush1.msra.mxu0 0.0
        %416 = vmatprep.subr.mxu0 0.0
        %417 = vmatpush1.msra.mxu0 0.0
        %418 = vmatprep.mubr.f32.mxu0 0.0
        %419 = vmatmul.mubr.f32.gmra.mrb[0].mxu0 %v307
        %v420 = vpop.f32.mrb[0].mxu0
        %v421 = vadd.f32 %v228, %v420
        %v422 = vpop.f32.mrb[0].mxu0
        %423 = vmatprep.mubr.f32.mxu0 0.0
        %424 = vmatmul.mubr.f32.gmra.mrb[0].mxu0 %v310
        %v425 = vpop.f32.mrb[0].mxu0
        %v426 = vadd.f32 %v233, %v425
        %v427 = vpop.f32.mrb[0].mxu0
        %428 = vmatprep.mubr.f32.mxu0 0.0
        %429 = vmatmul.mubr.f32.gmra.mrb[0].mxu0 %v313
        %v430 = vpop.f32.mrb[0].mxu0
        %v431 = vadd.f32 %v238, %v430
        %v432 = vpop.f32.mrb[0].mxu0
        %433 = vmatprep.mubr.f32.mxu0 0.0
        %434 = vmatmul.mubr.f32.gmra.mrb[0].mxu0 %v316
        %v435 = vpop.f32.mrb[0].mxu0
        %v436 = vadd.f32 %v243, %v435
        %v437 = vpop.f32.mrb[0].mxu0
        %438 = vmatprep.mubr.f32.mxu0 0.0
        %439 = vmatmul.mubr.f32.gmra.mrb[0].mxu0 %v319
        %v440 = vpop.f32.mrb[0].mxu0
        %v441 = vadd.f32 %v248, %v440
        %v442 = vpop.f32.mrb[0].mxu0
        %443 = vmatprep.mubr.f32.mxu0 0.0
        %444 = vmatmul.mubr.f32.gmra.mrb[0].mxu0 %v322
        %v445 = vpop.f32.mrb[0].mxu0
        %v446 = vadd.f32 %v253, %v445
        %v447 = vpop.f32.mrb[0].mxu0
        %448 = vmatprep.mubr.f32.mxu0 0.0
        %449 = vmatmul.mubr.f32.gmra.mrb[0].mxu0 %v325
        %v450 = vpop.f32.mrb[0].mxu0
        %v451 = vadd.f32 %v258, %v450
        %v452 = vpop.f32.mrb[0].mxu0
        %453 = vmatprep.mubr.f32.mxu0 0.0
        %454 = vmatmul.mubr.f32.gmra.mrb[0].mxu0 %v328
        %v455 = vpop.f32.mrb[0].mxu0
        %v456 = vadd.f32 %v263, %v455
        %v457 = vpop.f32.mrb[0].mxu0
        %458 = vmatprep.mubr.f32.mxu0 0.0
        %459 = vmatmul.mubr.f32.gmra.mrb[0].mxu0 %v331
        %v460 = vpop.f32.mrb[0].mxu0
        %v461 = vadd.f32 %v268, %v460
        %v462 = vpop.f32.mrb[0].mxu0
        %463 = vmatprep.mubr.f32.mxu0 0.0
        %464 = vmatmul.mubr.f32.gmra.mrb[0].mxu0 %v334
        %v465 = vpop.f32.mrb[0].mxu0
        %v466 = vadd.f32 %v273, %v465
        %v467 = vpop.f32.mrb[0].mxu0
        %468 = vmatprep.mubr.f32.mxu0 0.0
        %469 = vmatmul.mubr.f32.gmra.mrb[0].mxu0 %v337
        %v470 = vpop.f32.mrb[0].mxu0
        %v471 = vadd.f32 %v278, %v470
        %v472 = vpop.f32.mrb[0].mxu0
        %473 = vmatprep.mubr.f32.mxu0 0.0
        %474 = vmatmul.mubr.f32.gmra.mrb[0].mxu0 %v340
        %v475 = vpop.f32.mrb[0].mxu0
        %v476 = vadd.f32 %v283, %v475
        %v477 = vpop.f32.mrb[0].mxu0
        %478 = vmatprep.mubr.f32.mxu0 0.0
        %479 = vmatmul.mubr.f32.gmra.mrb[0].mxu0 %v343
        %v480 = vpop.f32.mrb[0].mxu0
        %v481 = vadd.f32 %v288, %v480
        %v482 = vpop.f32.mrb[0].mxu0
        %483 = vmatprep.mubr.f32.mxu0 0.0
        %484 = vmatmul.mubr.f32.gmra.mrb[0].mxu0 %v346
        %v485 = vpop.f32.mrb[0].mxu0
        %v486 = vadd.f32 %v293, %v485
        %v487 = vpop.f32.mrb[0].mxu0
        %488 = vmatprep.mubr.f32.mxu0 0.0
        %489 = vmatmul.mubr.f32.gmra.mrb[0].mxu0 %v349
        %v490 = vpop.f32.mrb[0].mxu0
        %v491 = vadd.f32 %v298, %v490
        %v492 = vpop.f32.mrb[0].mxu0
        %493 = vmatprep.mubr.f32.mxu0 0.0
        %494 = vmatmul.mubr.f32.gmra.mrb[0].mxu0 %v352
        %v495 = vpop.f32.mrb[0].mxu0
        %v496 = vadd.f32 %v303, %v495
        %v497 = vpop.f32.mrb[0].mxu0
        %498 = vdwg.mxu0
        %v499 = vmax.f32 %v421, 0.0
        %v500 = vmax.f32 %v426, 0.0
        %v501 = vmax.f32 %v431, 0.0
        %v502 = vmax.f32 %v436, 0.0
        %v503 = vmax.f32 %v441, 0.0
        %v504 = vmax.f32 %v446, 0.0
        %v505 = vmax.f32 %v451, 0.0
        %v506 = vmax.f32 %v456, 0.0
        %v507 = vmax.f32 %v461, 0.0
        %v508 = vmax.f32 %v466, 0.0
        %v509 = vmax.f32 %v471, 0.0
        %v510 = vmax.f32 %v476, 0.0
        %v511 = vmax.f32 %v481, 0.0
        %v512 = vmax.f32 %v486, 0.0
        %v513 = vmax.f32 %v491, 0.0
        %v514 = vmax.f32 %v496, 0.0
        %v515 = vld [vmem:[%s3] sm:$0xff]
        %v516 = vld [vmem:[%s3 + $0x8] sm:$0xff]
        %v517 = vld [vmem:[%s3 + $0x10] sm:$0xff]
        %v518 = vld [vmem:[%s3 + $0x18] sm:$0xff]
        %v519 = vld [vmem:[%s3 + $0x20] sm:$0xff]
        %v520 = vld [vmem:[%s3 + $0x28] sm:$0xff]
        %v521 = vld [vmem:[%s3 + $0x30] sm:$0xff]
        %v522 = vld [vmem:[%s3 + $0x38] sm:$0xff]
        %v523 = vld [vmem:[%s3 + $0x40] sm:$0xff]
        %v524 = vld [vmem:[%s3 + $0x48] sm:$0xff]
        %v525 = vld [vmem:[%s3 + $0x50] sm:$0xff]
        %v526 = vld [vmem:[%s3 + $0x58] sm:$0xff]
        %v527 = vld [vmem:[%s3 + $0x60] sm:$0xff]
        %v528 = vld [vmem:[%s3 + $0x68] sm:$0xff]
        %v529 = vld [vmem:[%s3 + $0x70] sm:$0xff]
        %v530 = vld [vmem:[%s3 + $0x78] sm:$0xff]
        %532 = vset.pattern.permute.xlu0 0
        %533 = vperm.xlu0 %532, %v515
        %v534 = vpop.permute.xlu0 %533
        %537 = vset.pattern.permute.xlu0 0
        %538 = vperm.xlu0 %537, %v516
        %v539 = vpop.permute.xlu0 %538
        %542 = vset.pattern.permute.xlu0 0
        %543 = vperm.xlu0 %542, %v517
        %v544 = vpop.permute.xlu0 %543
        %547 = vset.pattern.permute.xlu0 0
        %548 = vperm.xlu0 %547, %v518
        %v549 = vpop.permute.xlu0 %548
        %552 = vset.pattern.permute.xlu0 0
        %553 = vperm.xlu0 %552, %v519
        %v554 = vpop.permute.xlu0 %553
        %557 = vset.pattern.permute.xlu0 0
        %558 = vperm.xlu0 %557, %v520
        %v559 = vpop.permute.xlu0 %558
        %562 = vset.pattern.permute.xlu0 0
        %563 = vperm.xlu0 %562, %v521
        %v564 = vpop.permute.xlu0 %563
        %567 = vset.pattern.permute.xlu0 0
        %568 = vperm.xlu0 %567, %v522
        %v569 = vpop.permute.xlu0 %568
        %572 = vset.pattern.permute.xlu0 0
        %573 = vperm.xlu0 %572, %v523
        %v574 = vpop.permute.xlu0 %573
        %577 = vset.pattern.permute.xlu0 0
        %578 = vperm.xlu0 %577, %v524
        %v579 = vpop.permute.xlu0 %578
        %582 = vset.pattern.permute.xlu0 0
        %583 = vperm.xlu0 %582, %v525
        %v584 = vpop.permute.xlu0 %583
        %587 = vset.pattern.permute.xlu0 0
        %588 = vperm.xlu0 %587, %v526
        %v589 = vpop.permute.xlu0 %588
        %592 = vset.pattern.permute.xlu0 0
        %593 = vperm.xlu0 %592, %v527
        %v594 = vpop.permute.xlu0 %593
        %597 = vset.pattern.permute.xlu0 0
        %598 = vperm.xlu0 %597, %v528
        %v599 = vpop.permute.xlu0 %598
        %602 = vset.pattern.permute.xlu0 0
        %603 = vperm.xlu0 %602, %v529
        %v604 = vpop.permute.xlu0 %603
        %607 = vset.pattern.permute.xlu0 0
        %608 = vperm.xlu0 %607, %v530
        %v609 = vpop.permute.xlu0 %608
        %v611 = vmul.f32 %v499, %v534
        %v612 = vmul.f32 %v500, %v539
        %v613 = vmul.f32 %v501, %v544
        %v614 = vmul.f32 %v502, %v549
        %v615 = vmul.f32 %v503, %v554
        %v616 = vmul.f32 %v504, %v559
        %v617 = vmul.f32 %v505, %v564
        %v618 = vmul.f32 %v506, %v569
        %v619 = vmul.f32 %v507, %v574
        %v620 = vmul.f32 %v508, %v579
        %v621 = vmul.f32 %v509, %v584
        %v622 = vmul.f32 %v510, %v589
        %v623 = vmul.f32 %v511, %v594
        %v624 = vmul.f32 %v512, %v599
        %v625 = vmul.f32 %v513, %v604
        %v626 = vmul.f32 %v514, %v609
        %v627 = vadd.f32 %v611, %v612
        %v628 = vadd.f32 %v627, %v613
        %v629 = vadd.f32 %v628, %v614
        %v630 = vadd.f32 %v629, %v615
        %v631 = vadd.f32 %v630, %v616
        %v632 = vadd.f32 %v631, %v617
        %v633 = vadd.f32 %v632, %v618
        %v634 = vadd.f32 %v633, %v619
        %v635 = vadd.f32 %v634, %v620
        %v636 = vadd.f32 %v635, %v621
        %v637 = vadd.f32 %v636, %v622
        %v638 = vadd.f32 %v637, %v623
        %v639 = vadd.f32 %v638, %v624
        %v640 = vadd.f32 %v639, %v625
        %v641 = vadd.f32 %v640, %v626
        %v642 = vrot.slane %v641, 4
        %v643 = vadd.f32 %v641, %v642
        %v644 = vrot.slane %v643, 2
        %v645 = vadd.f32 %v643, %v644
        %v646 = vrot.slane %v645, 1
        %v647 = vadd.f32 %v645, %v646
        %v648 = vmax.f32 %v647, 0.0
        %649 = vst [vmem:[%s187] sm:$0x1] %v648
        %s650 = sand.u32 %s115, 1
        %s651 = scalar_lea.sflag [#allocation3], %s650
        %s652 = sand.u32 %s115, 1
        %s653 = scalar_lea.vmem [#allocation2], %s652
        // Predicated region
        $region37: #{qnet_forward_batched.1} parent=35 // pred_check
          %p654 = pneg %p125
        $region38: #{qnet_forward_batched.1} parent=35 // pred_check_branch
          %656 = sbr.rel (%p654) target = $region40
        $region39: #{qnet_forward_batched.1} parent=35 // pred_region
          %s658 = ssub.s32 16, 16
          %659 = vsyncadd %s651, %s658
          %s660 = smul.addr %s18, 16
          %s661 = scalar_lea.hbm %s4, %s660
          %s663 = sshll.u32 %s653, 4
          %s664 = int_to_ptr.vmem [resolvable:$true] %s663
          %666 = dma.vmem_to_hbm [thread:$0]  %s664, 16, %s661, %s651
        $region40: #{qnet_forward_batched.1} parent=35 // pred_fallthru
          _
      $region36: #{qnet_forward_batched.1} parent=5 // pred_fallthru
        _
      %p667 = scmp.le.s32.totalorder 2, %s13
      // Predicated region
      $region41: #{qnet_forward_batched.1} parent=5 // pred_check
        %p668 = pneg %p667
      $region42: #{qnet_forward_batched.1} parent=5 // pred_check_branch
        %670 = sbr.rel (%p668) target = $region44
      $region43: #{qnet_forward_batched.1} parent=5 // pred_region
        %s671 = ssub.s32 %s13, 2
        // Predicated region
        $region45: #{qnet_forward_batched.1} parent=43 // pred_check
          %p672 = pneg %p131
        $region46: #{qnet_forward_batched.1} parent=43 // pred_check_branch
          %674 = sbr.rel (%p672) target = $region48
        $region47: #{qnet_forward_batched.1} parent=43 // pred_region
          %s675 = sand.u32 %s116, 1
          %s676 = scalar_lea.sflag [#allocation3], %s675
          %s677 = sand.u32 %s116, 1
          %s678 = scalar_lea.vmem [#allocation2], %s677
          %679 = dma.done %s676, 16
        $region48: #{qnet_forward_batched.1} parent=43 // pred_fallthru
          _
      $region44: #{qnet_forward_batched.1} parent=5 // pred_fallthru
        _
    $region6: #{qnet_forward_batched.1} parent=1 // loop_footer
      %s17 = sadd.s32 1, %s13
    $region7: #{qnet_forward_batched.1} parent=1 // loop_footer_branch
      %12 = sbr.rel target = $region3
    $region8: #{qnet_forward_batched.1} parent=1 // loop_exit
      _
    %680 = vsyncpa [#allocation3], 1
    %s681 = scalar_lea.sflag [#allocation3], 1
    %682 = vsyncpa %s681, 1

</llo_original>
